<compile_context>
chip_gen: v5e
topology: v5e:2x2
jax: 0.10.0
libtpu: 0.0.40
codegen_flags: <defaults>
</compile_context>

<pallas_src>
import math
import functools

import jax
import jax.numpy as jnp
from jax.experimental import pallas as pl
from jax.experimental.pallas import tpu as pltpu


# ------------------------------ helpers -------------------------------------- #

def _choose_tile(dim, target, align):
    """Largest tile <= target that divides `dim` and is a multiple of `align`.
    Falls back to the full dimension (always legal per the (8,128) rule)."""
    if dim <= target:
        return dim
    t = (target // align) * align
    while t >= align:
        if dim % t == 0:
            return t
        t -= align
    return dim  # TODO(synk): pad awkward (prime) dims instead of using a full-dim tile.


def _probe_single_buffer():
    """Check whether pipeline_mode=pl.Buffered(1) is supported on this Pallas."""
    if not hasattr(pl, "Buffered"):
        return False
    try:
        def _k(x_ref, c_ref, o_ref):
            o_ref[...] = x_ref[...] + c_ref[...]

        x = jnp.zeros((16, 128), jnp.float32)
        c = jnp.ones((1, 128), jnp.float32)
        out = pl.pallas_call(
            _k,
            out_shape=jax.ShapeDtypeStruct((16, 128), jnp.float32),
            grid=(2,),
            in_specs=[pl.BlockSpec((8, 128), lambda i: (i, 0)),
                      pl.BlockSpec((1, 128), lambda i: (0, 0),
                                   pipeline_mode=pl.Buffered(1))],
            out_specs=pl.BlockSpec((8, 128), lambda i: (i, 0)),
        )(x, c)
        jax.block_until_ready(out)
        return bool(jnp.allclose(out, x + c))
    except Exception:
        return False


_SINGLE_BUF = _probe_single_buffer()


def _const_spec(block_shape, index_map):
    """BlockSpec for grid-invariant operands: single pipeline buffer if supported."""
    if _SINGLE_BUF:
        return pl.BlockSpec(block_shape, index_map, pipeline_mode=pl.Buffered(1))
    return pl.BlockSpec(block_shape, index_map)


# --------------------------- linear (x @ w + b [+res]) ------------------------ #

def _linear1_kernel(x_ref, w_ref, b_ref, o_ref):
    y = jnp.dot(x_ref[...].astype(jnp.bfloat16), w_ref[...].astype(jnp.bfloat16),
                preferred_element_type=jnp.float32)
    o_ref[...] = (y + b_ref[...]).astype(o_ref.dtype)


def _linear1_res_kernel(x_ref, w_ref, b_ref, r_ref, o_ref):
    y = jnp.dot(x_ref[...].astype(jnp.bfloat16), w_ref[...].astype(jnp.bfloat16),
                preferred_element_type=jnp.float32)
    o_ref[...] = (y + b_ref[...] + r_ref[...]).astype(o_ref.dtype)


def _lineark_kernel(x_ref, w_ref, b_ref, o_ref, acc_ref):
    @pl.when(pl.program_id(2) == 0)
    def _():
        acc_ref[...] = jnp.zeros_like(acc_ref)

    acc_ref[...] += jnp.dot(x_ref[...].astype(jnp.bfloat16),
                            w_ref[...].astype(jnp.bfloat16),
                            preferred_element_type=jnp.float32)

    @pl.when(pl.program_id(2) == pl.num_programs(2) - 1)
    def _():
        o_ref[...] = (acc_ref[...] + b_ref[...]).astype(o_ref.dtype)


def _lineark_res_kernel(x_ref, w_ref, b_ref, r_ref, o_ref, acc_ref):
    @pl.when(pl.program_id(2) == 0)
    def _():
        acc_ref[...] = jnp.zeros_like(acc_ref)

    acc_ref[...] += jnp.dot(x_ref[...].astype(jnp.bfloat16),
                            w_ref[...].astype(jnp.bfloat16),
                            preferred_element_type=jnp.float32)

    @pl.when(pl.program_id(2) == pl.num_programs(2) - 1)
    def _():
        o_ref[...] = (acc_ref[...] + b_ref[...] + r_ref[...]).astype(o_ref.dtype)


def linear(x2d, w, b, residual=None, *, tm=256, tn=512, tk=512):
    """Tiled (x @ w + b [+ residual]) with bf16 MXU operands and f32 accumulation.
    Uses a no-scratch epilogue when K fits in a single step."""
    M, K = x2d.shape
    N = w.shape[1]
    tm = _choose_tile(M, tm, 8)
    tn = _choose_tile(N, tn, 128)
    tk = _choose_tile(K, tk, 128)
    b2d = b.reshape(1, N)

    if K == tk:  # single K step -> skip the accumulator scratch entirely
        grid = (M // tm, N // tn)
        in_specs = [pl.BlockSpec((tm, K), lambda i, j: (i, 0)),
                    pl.BlockSpec((K, tn), lambda i, j: (0, j)),
                    pl.BlockSpec((1, tn), lambda i, j: (0, j))]
        args = [x2d, w, b2d]
        kernel = _linear1_kernel
        if residual is not None:
            in_specs.append(pl.BlockSpec((tm, tn), lambda i, j: (i, j)))
            args.append(residual)
            kernel = _linear1_res_kernel
        return pl.pallas_call(
            kernel,
            out_shape=jax.ShapeDtypeStruct((M, N), jnp.float32),
            grid=grid,
            in_specs=in_specs,
            out_specs=pl.BlockSpec((tm, tn), lambda i, j: (i, j)),
            compiler_params=pltpu.CompilerParams(
                dimension_semantics=("parallel", "parallel")),
        )(*args)

    grid = (M // tm, N // tn, K // tk)
    in_specs = [pl.BlockSpec((tm, tk), lambda i, j, k: (i, k)),
                pl.BlockSpec((tk, tn), lambda i, j, k: (k, j)),
                pl.BlockSpec((1, tn), lambda i, j, k: (0, j))]
    args = [x2d, w, b2d]
    kernel = _lineark_kernel
    if residual is not None:
        in_specs.append(pl.BlockSpec((tm, tn), lambda i, j, k: (i, j)))
        args.append(residual)
        kernel = _lineark_res_kernel
    return pl.pallas_call(
        kernel,
        out_shape=jax.ShapeDtypeStruct((M, N), jnp.float32),
        grid=grid,
        in_specs=in_specs,
        out_specs=pl.BlockSpec((tm, tn), lambda i, j, k: (i, j)),
        scratch_shapes=[pltpu.VMEM((tm, tn), jnp.float32)],
        compiler_params=pltpu.CompilerParams(
            dimension_semantics=("parallel", "parallel", "arbitrary")),
    )(*args)


# ------------------ fused LayerNorm + multi-head projection ------------------- #

def _ln_project_kernel(x_ref, g_ref, bt_ref, w_ref, bias_ref, o_ref, xn_ref, *, eps):
    # LayerNorm is computed once per row tile (first inner grid step) and cached
    # in a bf16 VMEM scratch; every (g, j) tile reuses it for the MXU matmul.
    @pl.when((pl.program_id(1) == 0) & (pl.program_id(2) == 0))
    def _():
        x = x_ref[...]
        mu = jnp.mean(x, axis=-1, keepdims=True)
        var = jnp.mean(jnp.square(x - mu), axis=-1, keepdims=True)
        xn = (x - mu) * jax.lax.rsqrt(var + eps) * g_ref[...] + bt_ref[...]
        xn_ref[...] = xn.astype(xn_ref.dtype)

    y = jnp.dot(xn_ref[...], w_ref[...].astype(jnp.bfloat16),
                preferred_element_type=jnp.float32)
    o_ref[...] = (y + bias_ref[...]).astype(o_ref.dtype)


def ln_project(x2d, gamma, beta, w_gdd, b_gd, *, eps=1e-5, tm=256, tn=512):
    """y[g] = LayerNorm(x) @ w[g] + b[g] for g in 0..G-1, output (G, M, D) bf16."""
    M, Din = x2d.shape
    G, _, Dout = w_gdd.shape
    tm = _choose_tile(M, tm, 8)
    tn = _choose_tile(Dout, tn, 128)
    grid = (M // tm, G, Dout // tn)
    return pl.pallas_call(
        functools.partial(_ln_project_kernel, eps=eps),
        out_shape=jax.ShapeDtypeStruct((G, M, Dout), jnp.bfloat16),
        grid=grid,
        in_specs=[
            pl.BlockSpec((tm, Din), lambda i, g, j: (i, 0)),
            _const_spec((1, Din), lambda i, g, j: (0, 0)),
            _const_spec((1, Din), lambda i, g, j: (0, 0)),
            pl.BlockSpec((None, Din, tn), lambda i, g, j: (g, 0, j)),
            pl.BlockSpec((None, 1, tn), lambda i, g, j: (g, 0, j)),
        ],
        out_specs=pl.BlockSpec((None, tm, tn), lambda i, g, j: (g, i, j)),
        scratch_shapes=[pltpu.VMEM((tm, Din), jnp.bfloat16)],
        compiler_params=pltpu.CompilerParams(
            dimension_semantics=("parallel", "arbitrary", "arbitrary")),
    )(x2d, gamma.reshape(1, Din), beta.reshape(1, Din),
      w_gdd, b_gd.reshape(G, 1, Dout))


# ------------------------- flash-style multi-head attention ------------------- #

def _flash_attn_kernel(q_ref, k_ref, v_ref, mask_ref, o_ref,
                       m_ref, l_ref, acc_ref, *, scale, n_head):
    D = q_ref.shape[-1]
    hd = D // n_head
    ki = pl.program_id(2)

    @pl.when(ki == 0)
    def _():
        m_ref[...] = jnp.full_like(m_ref, -jnp.inf)
        l_ref[...] = jnp.zeros_like(l_ref)
        acc_ref[...] = jnp.zeros_like(acc_ref)

    q = q_ref[...]                       # (tq, D) bf16
    k = k_ref[...]                       # (tk, D) bf16
    v = v_ref[...]                       # (tk, D) bf16
    keep = mask_ref[...] != 0            # (tq, tk), shared across heads
    neg = jnp.float32(-1e9)

    for h in range(n_head):              # static unroll; per-head lane slices
        sl = slice(h * hd, (h + 1) * hd)
        s = jax.lax.dot_general(q[:, sl], k[:, sl],
                                (((1,), (1,)), ((), ())),
                                preferred_element_type=jnp.float32) * scale
        s = jnp.where(keep, s, neg)
        m_prev = m_ref[h]
        m_new = jnp.maximum(m_prev, jnp.max(s, axis=-1, keepdims=True))
        alpha = jnp.exp(m_prev - m_new)
        p = jnp.exp(s - m_new)                               # f32 (tq, tk)
        l_ref[h] = alpha * l_ref[h] + jnp.sum(p, axis=-1, keepdims=True)
        pv = jax.lax.dot_general(p.astype(v.dtype), v[:, sl],
                                 (((1,), (0,)), ((), ())),
                                 preferred_element_type=jnp.float32)
        acc_ref[h] = alpha * acc_ref[h] + pv
        m_ref[h] = m_new

    @pl.when(ki == pl.num_programs(2) - 1)
    def _():
        # normalize AFTER the PV matmul (O(tq*hd) work) with an EUP reciprocal,
        # then one lane-dense (tq, D) store.
        parts = [acc_ref[h] * pl.reciprocal(l_ref[h], approx=True)
                 for h in range(n_head)]
        o_ref[...] = jnp.concatenate(parts, axis=-1).astype(o_ref.dtype)


def mha_attention(q_arr, q_g, kv_arr, k_g, v_g, mask, scale, n_head,
                  *, tq=256, tk=512):
    """q_arr: (Gq, B, Sq, D); kv_arr: (Gkv, B, Sk, D); mask: (B, 1, Sq, Sk) int.
    Output: (B, Sq, D) bf16.  Q/K/V selection is done purely via index_maps."""
    _, B, Sq, D = q_arr.shape
    Sk = kv_arr.shape[2]
    tq = _choose_tile(Sq, tq, 8)
    tk = _choose_tile(Sk, tk, 128)
    hd = D // n_head
    grid = (B, Sq // tq, Sk // tk)
    return pl.pallas_call(
        functools.partial(_flash_attn_kernel, scale=scale, n_head=n_head),
        out_shape=jax.ShapeDtypeStruct((B, Sq, D), jnp.bfloat16),
        grid=grid,
        in_specs=[
            pl.BlockSpec((None, None, tq, D), lambda b, qi, ki: (q_g, b, qi, 0)),
            pl.BlockSpec((None, None, tk, D), lambda b, qi, ki: (k_g, b, ki, 0)),
            pl.BlockSpec((None, None, tk, D), lambda b, qi, ki: (v_g, b, ki, 0)),
            pl.BlockSpec((None, None, tq, tk), lambda b, qi, ki: (b, 0, qi, ki)),
        ],
        out_specs=pl.BlockSpec((None, tq, D), lambda b, qi, ki: (b, qi, 0)),
        scratch_shapes=[pltpu.VMEM((n_head, tq, 1), jnp.float32),
                        pltpu.VMEM((n_head, tq, 1), jnp.float32),
                        pltpu.VMEM((n_head, tq, hd), jnp.float32)],
        compiler_params=pltpu.CompilerParams(
            dimension_semantics=("parallel", "parallel", "arbitrary")),
    )(q_arr, kv_arr, kv_arr, mask)


# ------------------------------ fused FFN kernel ------------------------------ #

_INV_SQRT2 = 1.0 / math.sqrt(2.0)


def _erf(x):
    # Abramowitz & Stegun 7.1.26 rational approximation (|err| <= 1.5e-7);
    # only exp + VPU arithmetic, lowers on all TPU generations.
    a1, a2, a3, a4, a5 = (0.254829592, -0.284496736, 1.421413741,
                          -1.453152027, 1.061405429)
    p = 0.3275911
    ax = jnp.abs(x)
    t = 1.0 / (1.0 + p * ax)
    poly = ((((a5 * t + a4) * t + a3) * t + a2) * t + a1) * t
    y = 1.0 - poly * jnp.exp(-ax * ax)
    return jnp.where(x < 0.0, -y, y)


def _gelu_exact(x):
    return 0.5 * x * (1.0 + _erf(x * _INV_SQRT2))


def _ffn_kernel(x_ref, g_ref, bt_ref, w1_ref, b1_ref, w2_ref, b2_ref, o_ref,
                xn_ref, acc_ref, *, eps):
    # o = x + (GELU(LayerNorm(x) @ w1 + b1) @ w2 + b2), hidden dim F tiled on axis 1.
    fj = pl.program_id(1)

    @pl.when(fj == 0)
    def _():
        x = x_ref[...]
        mu = jnp.mean(x, axis=-1, keepdims=True)
        var = jnp.mean(jnp.square(x - mu), axis=-1, keepdims=True)
        xn = (x - mu) * jax.lax.rsqrt(var + eps) * g_ref[...] + bt_ref[...]
        xn_ref[...] = xn.astype(xn_ref.dtype)
        acc_ref[...] = jnp.zeros_like(acc_ref)

    h = jnp.dot(xn_ref[...], w1_ref[...].astype(jnp.bfloat16),
                preferred_element_type=jnp.float32) + b1_ref[...]
    h = _gelu_exact(h)
    acc_ref[...] += jnp.dot(h.astype(jnp.bfloat16), w2_ref[...].astype(jnp.bfloat16),
                            preferred_element_type=jnp.float32)

    @pl.when(fj == pl.num_programs(1) - 1)
    def _():
        o_ref[...] = (x_ref[...] + acc_ref[...] + b2_ref[...]).astype(o_ref.dtype)


def ffn_fused(x2d, gamma, beta, w1, b1, w2, b2, *, eps=1e-5, tm=256, tf=512):
    M, D = x2d.shape
    F = w1.shape[1]
    tm = _choose_tile(M, tm, 8)
    tf = _choose_tile(F, tf, 128)
    grid = (M // tm, F // tf)
    return pl.pallas_call(
        functools.partial(_ffn_kernel, eps=eps),
        out_shape=jax.ShapeDtypeStruct((M, D), jnp.float32),
        grid=grid,
        in_specs=[
            pl.BlockSpec((tm, D), lambda i, j: (i, 0)),
            _const_spec((1, D), lambda i, j: (0, 0)),
            _const_spec((1, D), lambda i, j: (0, 0)),
            pl.BlockSpec((D, tf), lambda i, j: (0, j)),
            pl.BlockSpec((1, tf), lambda i, j: (0, j)),
            pl.BlockSpec((tf, D), lambda i, j: (j, 0)),
            _const_spec((1, D), lambda i, j: (0, 0)),
        ],
        out_specs=pl.BlockSpec((tm, D), lambda i, j: (i, 0)),
        scratch_shapes=[pltpu.VMEM((tm, D), jnp.bfloat16),
                        pltpu.VMEM((tm, D), jnp.float32)],
        compiler_params=pltpu.CompilerParams(
            dimension_semantics=("parallel", "arbitrary")),
    )(x2d, gamma.reshape(1, D), beta.reshape(1, D),
      w1, b1.reshape(1, F), w2, b2.reshape(1, D))


# --------------------------- model forward (glue) ----------------------------- #

def self_attention_block(p, ln_g, ln_b, dec2d, mask, B, S, n_head):
    D = dec2d.shape[1]
    qkv = ln_project(dec2d, ln_g, ln_b, p['w_qkv'], p['b_qkv'])     # (3, B*S, D) bf16
    qkv = qkv.reshape(3, B, S, D)                                   # free view
    ctx = mha_attention(qkv, 0, qkv, 1, 2, mask,
                        1.0 / math.sqrt(D // n_head), n_head)       # (B, S, D) bf16
    return linear(ctx.reshape(B * S, D), p['wo'], p['bo'], residual=dec2d)


def cross_attention_block(p, ln_g, ln_b, dec2d, enc2d, mask, B, Sq, Sk, n_head):
    D = dec2d.shape[1]
    # NOTE: matches the reference, which applies cross_attn_norm to both the
    # decoder stream and the encoder memory.
    q = ln_project(dec2d, ln_g, ln_b, p['wq'], p['bq']).reshape(1, B, Sq, D)
    kv = ln_project(enc2d, ln_g, ln_b, p['w_kv'], p['b_kv']).reshape(2, B, Sk, D)
    ctx = mha_attention(q, 0, kv, 0, 1, mask,
                        1.0 / math.sqrt(D // n_head), n_head)
    return linear(ctx.reshape(B * Sq, D), p['wo'], p['bo'], residual=dec2d)


def decoder_layer(p, dec2d, enc2d, t_mask, s_mask, B, S_dec, S_enc, n_head):
    # Dropout layers are identity (inference/eval semantics).
    dec2d = self_attention_block(p['self_attn'], p['sa_ln_g'], p['sa_ln_b'],
                                 dec2d, s_mask, B, S_dec, n_head)
    dec2d = cross_attention_block(p['cross_attn'], p['ca_ln_g'], p['ca_ln_b'],
                                  dec2d, enc2d, t_mask, B, S_dec, S_enc, n_head)
    dec2d = ffn_fused(dec2d, p['ffn_ln_g'], p['ffn_ln_b'],
                      p['ffn_w1'], p['ffn_b1'], p['ffn_w2'], p['ffn_b2'])
    return dec2d


def decoder_forward(params, dec_ids, enc, t_mask, s_mask, n_head):
    B, S = dec_ids.shape
    S_enc = enc.shape[1]
    d_model = params['tok_emb'].shape[1]
    voc = params['voc_size']

    # token-embedding gather + positional add kept in plain JAX
    tok = params['tok_emb'][dec_ids] * math.sqrt(d_model)
    x = tok + params['pos_enc'][:S][None, :, :]

    dec2d = x.reshape(B * S, d_model).astype(jnp.float32)
    enc2d = enc.reshape(B * S_enc, d_model).astype(jnp.float32)
    s_mask = s_mask.astype(jnp.int32)
    t_mask = t_mask.astype(jnp.int32)

    for lp in params['layers']:
        dec2d = decoder_layer(lp, dec2d, enc2d, t_mask, s_mask,
                              B, S, S_enc, n_head)

    # final vocab projection (weights pre-padded to a multiple of 128 at init)
    logits = linear(dec2d, params['fc_w'], params['fc_b'])
    # TODO(synk): keep logits padded until the downstream consumer when possible.
    return logits[:, :voc].reshape(B, S, voc)


# --------------------------------- param init --------------------------------- #

def _xavier_uniform(key, fan_in, fan_out):
    limit = math.sqrt(6.0 / (fan_in + fan_out))
    return jax.random.uniform(key, (fan_in, fan_out), jnp.float32, -limit, limit)


def _bias(key, fan_in, n):
    bound = 1.0 / math.sqrt(fan_in)
    return jax.random.uniform(key, (n,), jnp.float32, -bound, bound)


def _positional_encoding(max_len, d):
    pos = jnp.arange(max_len, dtype=jnp.float32)[:, None]
    div = jnp.exp(jnp.arange(0, d, 2, dtype=jnp.float32) * (-math.log(10000.0) / d))
    enc = jnp.zeros((max_len, d), jnp.float32)
    enc = enc.at[:, 0::2].set(jnp.sin(pos * div))
    enc = enc.at[:, 1::2].set(jnp.cos(pos * div))
    return enc


def _init_self_mha(key, d):
    ks = jax.random.split(key, 8)
    wq, wk, wv = (_xavier_uniform(ks[i], d, d) for i in (0, 1, 2))
    bq, bk, bv = (_bias(ks[i], d, d) for i in (3, 4, 5))
    return {
        'w_qkv': jnp.stack([wq, wk, wv]).astype(jnp.bfloat16),     # (3, D, D)
        'b_qkv': jnp.stack([bq, bk, bv]),                          # (3, D) f32
        'wo': _xavier_uniform(ks[6], d, d).astype(jnp.bfloat16),
        'bo': _bias(ks[7], d, d),
    }


def _init_cross_mha(key, d):
    ks = jax.random.split(key, 8)
    wq, wk, wv = (_xavier_uniform(ks[i], d, d) for i in (0, 1, 2))
    bq, bk, bv = (_bias(ks[i], d, d) for i in (3, 4, 5))
    return {
        'wq': wq[None].astype(jnp.bfloat16),                       # (1, D, D)
        'bq': bq[None],                                            # (1, D)
        'w_kv': jnp.stack([wk, wv]).astype(jnp.bfloat16),          # (2, D, D)
        'b_kv': jnp.stack([bk, bv]),
        'wo': _xavier_uniform(ks[6], d, d).astype(jnp.bfloat16),
        'bo': _bias(ks[7], d, d),
    }


def _init_layer(key, d_model, ffn_hidden):
    ks = jax.random.split(key, 6)
    return {
        'sa_ln_g': jnp.ones((d_model,), jnp.float32), 'sa_ln_b': jnp.zeros((d_model,), jnp.float32),
        'ca_ln_g': jnp.ones((d_model,), jnp.float32), 'ca_ln_b': jnp.zeros((d_model,), jnp.float32),
        'ffn_ln_g': jnp.ones((d_model,), jnp.float32), 'ffn_ln_b': jnp.zeros((d_model,), jnp.float32),
        'self_attn': _init_self_mha(ks[0], d_model),
        'cross_attn': _init_cross_mha(ks[1], d_model),
        'ffn_w1': _xavier_uniform(ks[2], d_model, ffn_hidden).astype(jnp.bfloat16),
        'ffn_b1': _bias(ks[3], d_model, ffn_hidden),
        'ffn_w2': _xavier_uniform(ks[4], ffn_hidden, d_model).astype(jnp.bfloat16),
        'ffn_b2': _bias(ks[5], ffn_hidden, d_model),
    }


def init_params(key, voc, max_len, d_model, ffn_hidden, n_layer):
    ks = jax.random.split(key, n_layer + 3)
    tok = jax.random.normal(ks[0], (voc, d_model), jnp.float32) * (d_model ** -0.5)
    tok = tok.at[0].set(0.0)  # padding_idx=0
    lim = 1.0 / math.sqrt(d_model)
    fc_w = jax.random.uniform(ks[-2], (d_model, voc), jnp.float32, -lim, lim)
    fc_b = jax.random.uniform(ks[-1], (voc,), jnp.float32, -lim, lim)
    voc_pad = voc + ((-voc) % 128)       # lane-dense vocab projection, padded once
    fc_w = jnp.pad(fc_w, ((0, 0), (0, voc_pad - voc))).astype(jnp.bfloat16)
    fc_b = jnp.pad(fc_b, ((0, voc_pad - voc),))
    return {
        'voc_size': voc,
        'tok_emb': tok,
        'pos_enc': _positional_encoding(max_len, d_model),
        'layers': [_init_layer(ks[1 + i], d_model, ffn_hidden) for i in range(n_layer)],
        'fc_w': fc_w,
        'fc_b': fc_b,
    }


# ------------------------------------ main ------------------------------------ #

if __name__ == "__main__":
    voc_size, max_len = 64, 16
    d_model, ffn_hidden, n_head, n_layer = 32, 64, 4, 2
    B, S_dec, S_enc = 2, 8, 8

    key = jax.random.PRNGKey(0)
    pkey, dkey, ekey = jax.random.split(key, 3)

    params = init_params(pkey, voc_size, max_len, d_model, ffn_hidden, n_layer)

    dec_ids = jax.random.randint(dkey, (B, S_dec), 0, voc_size, dtype=jnp.int32)
    enc = jax.random.normal(ekey, (B, S_enc, d_model), jnp.float32)

    # causal mask for decoder self-attention, full mask for cross-attention
    s_mask = jnp.broadcast_to(
        jnp.tril(jnp.ones((S_dec, S_dec), jnp.int32))[None, None],
        (B, 1, S_dec, S_dec))
    t_mask = jnp.ones((B, 1, S_dec, S_enc), jnp.int32)

    out = decoder_forward(params, dec_ids, enc, t_mask, s_mask, n_head)
    out = jax.block_until_ready(out)
    assert out.shape == (B, S_dec, voc_size), out.shape
    assert bool(jnp.all(jnp.isfinite(out)))
    print("KERNEL_OK")
</pallas_src>

<mosaic_0001>
module attributes {stable_mosaic.version = 11 : i64} {
  func.func @_k(%arg0: i32, %arg1: memref<8x128xf32, #tpu.memory_space<vmem>>, %arg2: memref<1x128xf32, #tpu.memory_space<vmem>>, %arg3: memref<8x128xf32, #tpu.memory_space<vmem>>) attributes {dimension_semantics = [#tpu.dimension_semantics<arbitrary>], iteration_bounds = array<i64: 2>, scalar_prefetch = 0 : i64, scratch_operands = 0 : i64, tpu.core_type = #tpu.core_type<tc>, window_params = [{transform_indices = @transform_0, window_bounds = array<i64: 8, 128>}, {pipeline_mode = #tpu.pipeline_mode<synchronous>, transform_indices = @transform_1, window_bounds = array<i64: 1, 128>}, {transform_indices = @transform_2, window_bounds = array<i64: 8, 128>}]} {
    %c0 = arith.constant 0 : index
    %c0_0 = arith.constant 0 : index
    %0 = vector.load %arg1[%c0, %c0_0] : memref<8x128xf32, #tpu.memory_space<vmem>>, vector<8x128xf32>
    %c0_1 = arith.constant 0 : index
    %c0_2 = arith.constant 0 : index
    %1 = vector.load %arg2[%c0_1, %c0_2] : memref<1x128xf32, #tpu.memory_space<vmem>>, vector<1x128xf32>
    %2 = vector.broadcast %1 : vector<1x128xf32> to vector<8x128xf32>
    %3 = arith.addf %0, %2 : vector<8x128xf32>
    %c0_3 = arith.constant 0 : index
    %c0_4 = arith.constant 0 : index
    %4 = vector.load %arg3[%c0_3, %c0_4] : memref<8x128xf32, #tpu.memory_space<vmem>>, vector<8x128xf32>
    tpu.vector_store %arg3[%c0_3, %c0_4], %3 {strides = array<i32>} : memref<8x128xf32, #tpu.memory_space<vmem>>, vector<8x128xf32>,
    return
  }
  func.func @transform_0(%arg0: i32) -> (i32, i32) {
    %c0_i32 = arith.constant 0 : i32
    %c0_i32_0 = arith.constant 0 : i32
    return %arg0, %c0_i32 : i32, i32
  }
  func.func @transform_1(%arg0: i32) -> (i32, i32) {
    %c0_i32 = arith.constant 0 : i32
    %c0_i32_0 = arith.constant 0 : i32
    %c0_i32_1 = arith.constant 0 : i32
    return %c0_i32, %c0_i32_0 : i32, i32
  }
  func.func @transform_2(%arg0: i32) -> (i32, i32) {
    %c0_i32 = arith.constant 0 : i32
    %c0_i32_0 = arith.constant 0 : i32
    return %arg0, %c0_i32 : i32, i32
  }
}

module attributes {stable_mosaic.version = 11 : i64} {
  func.func @_ln_project_kernel(%arg0: i32, %arg1: i32, %arg2: i32, %arg3: memref<16x32xf32, #tpu.memory_space<vmem>>, %arg4: memref<1x32xf32, #tpu.memory_space<vmem>>, %arg5: memref<1x32xf32, #tpu.memory_space<vmem>>, %arg6: memref<1x32x32xbf16, #tpu.memory_space<vmem>>, %arg7: memref<1x1x32xf32, #tpu.memory_space<vmem>>, %arg8: memref<1x16x32xbf16, #tpu.memory_space<vmem>>, %arg9: memref<16x32xbf16, #tpu.memory_space<vmem>>) attributes {dimension_semantics = [#tpu.dimension_semantics<parallel>, #tpu.dimension_semantics<arbitrary>, #tpu.dimension_semantics<arbitrary>], iteration_bounds = array<i64: 1, 3, 1>, scalar_prefetch = 0 : i64, scratch_operands = 1 : i64, tpu.core_type = #tpu.core_type<tc>, window_params = [{transform_indices = @transform_0, window_bounds = array<i64: 16, 32>}, {pipeline_mode = #tpu.pipeline_mode<synchronous>, transform_indices = @transform_1, window_bounds = array<i64: 1, 32>}, {pipeline_mode = #tpu.pipeline_mode<synchronous>, transform_indices = @transform_2, window_bounds = array<i64: 1, 32>}, {transform_indices = @transform_3, window_bounds = array<i64: 1, 32, 32>}, {transform_indices = @transform_4, window_bounds = array<i64: 1, 1, 32>}, {transform_indices = @transform_5, window_bounds = array<i64: 1, 16, 32>}]} {
    %c0_i32 = arith.constant 0 : i32
    %0 = arith.cmpi eq, %arg1, %c0_i32 : i32
    %c0_i32_0 = arith.constant 0 : i32
    %1 = arith.cmpi eq, %arg2, %c0_i32_0 : i32
    %2 = arith.andi %0, %1 : i1
    %3 = arith.extui %2 : i1 to i32
    %c0_i32_1 = arith.constant 0 : i32
    %4 = arith.cmpi ne, %3, %c0_i32_1 : i32
    scf.if %4 {
      %c0_12 = arith.constant 0 : index
      %c0_13 = arith.constant 0 : index
      %17 = vector.load %arg3[%c0_12, %c0_13] : memref<16x32xf32, #tpu.memory_space<vmem>>, vector<16x32xf32>
      %cst_14 = arith.constant dense<0.000000e+00> : vector<16xf32>
      %18 = vector.multi_reduction <add>, %17, %cst_14 [1] : vector<16x32xf32> to vector<16xf32>
      %19 = vector.shape_cast %18 : vector<16xf32> to vector<16x1xf32>
      %cst_15 = arith.constant 3.200000e+01 : f32
      %20 = vector.broadcast %cst_15 : f32 to vector<16x1xf32>
      %21 = arith.divf %19, %20 : vector<16x1xf32>
      %22 = vector.broadcast %21 : vector<16x1xf32> to vector<16x32xf32>
      %23 = arith.subf %17, %22 : vector<16x32xf32>
      %24 = arith.mulf %23, %23 : vector<16x32xf32>
      %cst_16 = arith.constant dense<0.000000e+00> : vector<16xf32>
      %25 = vector.multi_reduction <add>, %24, %cst_16 [1] : vector<16x32xf32> to vector<16xf32>
      %26 = vector.shape_cast %25 : vector<16xf32> to vector<16x1xf32>
      %cst_17 = arith.constant 3.200000e+01 : f32
      %27 = vector.broadcast %cst_17 : f32 to vector<16x1xf32>
      %28 = arith.divf %26, %27 : vector<16x1xf32>
      %29 = vector.broadcast %21 : vector<16x1xf32> to vector<16x32xf32>
      %30 = arith.subf %17, %29 : vector<16x32xf32>
      %cst_18 = arith.constant 9.99999974E-6 : f32
      %31 = vector.broadcast %cst_18 : f32 to vector<16x1xf32>
      %32 = arith.addf %28, %31 : vector<16x1xf32>
      %33 = math.rsqrt %32 : vector<16x1xf32>
      %34 = vector.broadcast %33 : vector<16x1xf32> to vector<16x32xf32>
      %35 = arith.mulf %30, %34 : vector<16x32xf32>
      %c0_19 = arith.constant 0 : index
      %c0_20 = arith.constant 0 : index
      %36 = vector.load %arg4[%c0_19, %c0_20] : memref<1x32xf32, #tpu.memory_space<vmem>>, vector<1x32xf32>
      %37 = vector.broadcast %36 : vector<1x32xf32> to vector<16x32xf32>
      %38 = arith.mulf %35, %37 : vector<16x32xf32>
      %c0_21 = arith.constant 0 : index
      %c0_22 = arith.constant 0 : index
      %39 = vector.load %arg5[%c0_21, %c0_22] : memref<1x32xf32, #tpu.memory_space<vmem>>, vector<1x32xf32>
      %40 = vector.broadcast %39 : vector<1x32xf32> to vector<16x32xf32>
      %41 = arith.addf %38, %40 : vector<16x32xf32>
      %42 = arith.truncf %41 : vector<16x32xf32> to vector<16x32xbf16>
      %c0_23 = arith.constant 0 : index
      %c0_24 = arith.constant 0 : index
      %43 = vector.load %arg9[%c0_23, %c0_24] : memref<16x32xbf16, #tpu.memory_space<vmem>>, vector<16x32xbf16>
      tpu.vector_store %arg9[%c0_23, %c0_24], %42 {strides = array<i32>} : memref<16x32xbf16, #tpu.memory_space<vmem>>, vector<16x32xbf16>,
    } else {
    }
    %c0 = arith.constant 0 : index
    %c0_2 = arith.constant 0 : index
    %5 = vector.load %arg9[%c0, %c0_2] : memref<16x32xbf16, #tpu.memory_space<vmem>>, vector<16x32xbf16>
    %c0_3 = arith.constant 0 : index
    %c0_4 = arith.constant 0 : index
    %c0_5 = arith.constant 0 : index
    %6 = vector.load %arg6[%c0_3, %c0_4, %c0_5] : memref<1x32x32xbf16, #tpu.memory_space<vmem>>, vector<1x32x32xbf16>
    %7 = vector.shape_cast %6 : vector<1x32x32xbf16> to vector<32x32xbf16>
    %cst = arith.constant dense<0.000000e+00> : vector<16x32xf32>
    %8 = tpu.matmul %5, %7, %cst {dimension_numbers = #tpu.dot_dimension_numbers<[1], [0], [0], [1], [0, 0, 1, 1], [], []>} : vector<16x32xbf16>, vector<32x32xbf16>, vector<16x32xf32> -> vector<16x32xf32>
    %c0_6 = arith.constant 0 : index
    %c0_7 = arith.constant 0 : index
    %c0_8 = arith.constant 0 : index
    %9 = vector.load %arg7[%c0_6, %c0_7, %c0_8] : memref<1x1x32xf32, #tpu.memory_space<vmem>>, vector<1x1x32xf32>
    %10 = vector.shape_cast %9 : vector<1x1x32xf32> to vector<1x32xf32>
    %11 = vector.broadcast %10 : vector<1x32xf32> to vector<16x32xf32>
    %12 = arith.addf %8, %11 : vector<16x32xf32>
    %13 = arith.truncf %12 : vector<16x32xf32> to vector<16x32xbf16>
    %c0_9 = arith.constant 0 : index
    %c0_10 = arith.constant 0 : index
    %c0_11 = arith.constant 0 : index
    %14 = vector.load %arg8[%c0_9, %c0_10, %c0_11] : memref<1x16x32xbf16, #tpu.memory_space<vmem>>, vector<1x16x32xbf16>
    %15 = vector.shape_cast %14 : vector<1x16x32xbf16> to vector<16x32xbf16>
    %16 = vector.shape_cast %13 : vector<16x32xbf16> to vector<1x16x32xbf16>
    tpu.vector_store %arg8[%c0_9, %c0_10, %c0_11], %16 {strides = array<i32>} : memref<1x16x32xbf16, #tpu.memory_space<vmem>>, vector<1x16x32xbf16>,
    return
  }
  func.func @transform_0(%arg0: i32, %arg1: i32, %arg2: i32) -> (i32, i32) {
    %c0_i32 = arith.constant 0 : i32
    %c0_i32_0 = arith.constant 0 : i32
    return %arg0, %c0_i32 : i32, i32
  }
  func.func @transform_1(%arg0: i32, %arg1: i32, %arg2: i32) -> (i32, i32) {
    %c0_i32 = arith.constant 0 : i32
    %c0_i32_0 = arith.constant 0 : i32
    %c0_i32_1 = arith.constant 0 : i32
    return %c0_i32, %c0_i32_0 : i32, i32
  }
  func.func @transform_2(%arg0: i32, %arg1: i32, %arg2: i32) -> (i32, i32) {
    %c0_i32 = arith.constant 0 : i32
    %c0_i32_0 = arith.constant 0 : i32
    %c0_i32_1 = arith.constant 0 : i32
    return %c0_i32, %c0_i32_0 : i32, i32
  }
  func.func @transform_3(%arg0: i32, %arg1: i32, %arg2: i32) -> (i32, i32, i32) {
    %c0_i32 = arith.constant 0 : i32
    %c0_i32_0 = arith.constant 0 : i32
    return %arg1, %c0_i32, %arg2 : i32, i32, i32
  }
  func.func @transform_4(%arg0: i32, %arg1: i32, %arg2: i32) -> (i32, i32, i32) {
    %c0_i32 = arith.constant 0 : i32
    %c0_i32_0 = arith.constant 0 : i32
    return %arg1, %c0_i32, %arg2 : i32, i32, i32
  }
  func.func @transform_5(%arg0: i32, %arg1: i32, %arg2: i32) -> (i32, i32, i32) {
    %c0_i32 = arith.constant 0 : i32
    return %arg1, %arg0, %arg2 : i32, i32, i32
  }
}

</mosaic_0001>

<llo_original>
// kernel: tpu_custom_call.1
$region0: #{tpu_custom_call.1}
  #allocation0 [shape = 'u32[]', space=smem, size = 0x4, offset = 0x4, fixed_abs, tag = 'smem constant byte address 0x4 - core index']
  #allocation1 [shape = 'u32[72,128]{1,0:T(1,128)}', space=vmem, size = 0x9000, scoped, tag = 'internal scratch']
  %s0 = inlined_call_operand.hbm [shape: f32[16,128], index: 0, kind: input, shape index: {}]
  %s1 = inlined_call_operand.hbm [shape: f32[1,128], index: 1, kind: input, shape index: {}]
  %s2 = inlined_call_operand.hbm [shape: f32[16,128], index: 2, kind: output, shape index: {}]
  %s3 = sld [smem:[#allocation0]]
  $region49: #{tpu_custom_call.1} parent=0
    _
  %s5 = ssub.s32 1, %s3
  %s6 = scalar_select 0, %s5, %s3
  $region1: #{tpu_custom_call.1} parent=0
    #allocation2 [shape = 'u8[8192]{0}', space=vmem, size = 0x2000, scoped, tag = 'input window, operand 0']
    #allocation3 [shape = 's32[2]{0}', space=sflag, size = 0x8, scoped, tag = 'scoped memory for tpu_custom_call.1']
    #allocation4 [shape = 's32[2]{0}', space=sflag, size = 0x8, scoped, tag = 'scoped memory for tpu_custom_call.1']
    #allocation5 [shape = 'u8[512]{0}', space=vmem, size = 0x400, scoped, tag = 'input window, operand 1, single buffered']
    #allocation6 [shape = 's32[1]{0}', space=sflag, size = 0x4, scoped, tag = 'scoped memory for tpu_custom_call.1']
    #allocation7 [shape = 'u8[8192]{0}', space=vmem, size = 0x2000, scoped, tag = 'output window, operand 0']
    %7 = vsyncpa [#allocation3], 0
    %s8 = scalar_lea.sflag [#allocation3], 1
    %9 = vsyncpa %s8, 0
    %10 = vsyncpa [#allocation6], 0
    %11 = vsyncpa [#allocation4], 0
    %s12 = scalar_lea.sflag [#allocation4], 1
    %13 = vsyncpa %s12, 0
    loop: start=0, step=1, limit=4
    $region2: #{tpu_custom_call.1} parent=1 // loop_pre_header
      _
    $region3: #{tpu_custom_call.1} parent=1 // loop_header
      %s15 = sphi 0, %s19
      %p16 = scmp.ge.s32.totalorder %s15, 4
      %s25 = sphi 0, %s27
      %s28 = sphi 0, %s25
      %s29 = sphi 0, %s28
      %s45 = sphi 0, %s29
      %s49 = sphi 0, %s49
      %s51 = sphi 0, %s49
      %s52 = sphi 0, %s51
      %s66 = sphi 0, %s52
      %s72 = sphi 0, %s74
      %s75 = sphi 0, %s72
      %s76 = sphi 0, %s75
      %s92 = sphi 0, %s76
    $region4: #{tpu_custom_call.1} parent=1 // loop_header_branch
      %18 = sbr.rel (%p16) target = $region8
    $region5: #{tpu_custom_call.1} parent=1 // loop_body
      %s20 = ssub.s32 %s15, 1
      %s21 = ssub.s32 %s15, 2
      %s22 = sadd.s32 %s15, 1
      %s23 = ssub.s32 %s15, %s22
      %p24 = scmp.eq.s32.totalorder %s23, 0
      %s26 = sadd.s32 %s25, 1
      %s27 = scalar_select %p24, %s25, %s26
      %p30 = pneg %p24
      %p31 = scmp.eq.s32.totalorder %s15, 1
      %p32 = por %p30, %p31
      %p33 = scmp.ne.s32.totalorder %s25, %s28
      %p34 = scmp.eq.s32.totalorder %s15, 0
      %p35 = por %p33, %p34
      %p36 = scmp.ne.s32.totalorder %s25, %s28
      %p37 = scmp.eq.s32.totalorder %s20, 1
      %p38 = por %p36, %p37
      %p39 = scmp.ne.s32.totalorder %s28, %s29
      %p40 = scmp.eq.s32.totalorder %s20, 0
      %p41 = por %p39, %p40
      %p42 = scmp.ne.s32.totalorder %s28, %s29
      %p43 = scmp.eq.s32.totalorder %s21, 1
      %p44 = por %p42, %p43
      %p46 = scmp.ne.s32.totalorder %s29, %s45
      %p47 = scmp.eq.s32.totalorder %s21, 0
      %p48 = por %p46, %p47
      %s50 = sadd.s32 %s49, 1
      %p53 = scmp.eq.s32.totalorder %s15, 1
      %p54 = scmp.ne.s32.totalorder %s49, %s51
      %p55 = scmp.eq.s32.totalorder %s15, 0
      %p56 = por %p54, %p55
      %p57 = scmp.ne.s32.totalorder %s49, %s51
      %p58 = scmp.eq.s32.totalorder %s20, 1
      %p59 = por %p57, %p58
      %p60 = scmp.ne.s32.totalorder %s51, %s52
      %p61 = scmp.eq.s32.totalorder %s20, 0
      %p62 = por %p60, %p61
      %p63 = scmp.ne.s32.totalorder %s51, %s52
      %p64 = scmp.eq.s32.totalorder %s21, 1
      %p65 = por %p63, %p64
      %p67 = scmp.ne.s32.totalorder %s52, %s66
      %p68 = scmp.eq.s32.totalorder %s21, 0
      %p69 = por %p67, %p68
      %s70 = ssub.s32 %s15, %s22
      %p71 = scmp.eq.s32.totalorder %s70, 0
      %s73 = sadd.s32 %s72, 1
      %s74 = scalar_select %p71, %s72, %s73
      %p77 = pneg %p71
      %p78 = scmp.eq.s32.totalorder %s15, 1
      %p79 = por %p77, %p78
      %p80 = scmp.ne.s32.totalorder %s72, %s75
      %p81 = scmp.eq.s32.totalorder %s15, 0
      %p82 = por %p80, %p81
      %p83 = scmp.ne.s32.totalorder %s72, %s75
      %p84 = scmp.eq.s32.totalorder %s20, 1
      %p85 = por %p83, %p84
      %p86 = scmp.ne.s32.totalorder %s75, %s76
      %p87 = scmp.eq.s32.totalorder %s20, 0
      %p88 = por %p86, %p87
      %p89 = scmp.ne.s32.totalorder %s75, %s76
      %p90 = scmp.eq.s32.totalorder %s21, 1
      %p91 = por %p89, %p90
      %p93 = scmp.ne.s32.totalorder %s76, %s92
      %p94 = scmp.eq.s32.totalorder %s21, 0
      %p95 = por %p93, %p94
      %p96 = scmp.le.s32.totalorder 1, %s15
      %p97 = scmp.lt.s32.totalorder %s15, 3
      %p98 = pnand %p96, %p97
      %p99 = pneg %p98
      // Predicated region
      $region9: #{tpu_custom_call.1} parent=5 // pred_check
        _
      $region10: #{tpu_custom_call.1} parent=5 // pred_check_branch
        %101 = sbr.rel (%p98) target = $region12
      $region11: #{tpu_custom_call.1} parent=5 // pred_region
        %s102 = ssub.s32 %s15, 1
        // Predicated region
        $region13: #{tpu_custom_call.1} parent=11 // pred_check
          %p103 = pneg %p62
        $region14: #{tpu_custom_call.1} parent=11 // pred_check_branch
          %105 = sbr.rel (%p103) target = $region16
        $region15: #{tpu_custom_call.1} parent=11 // pred_region
          %107 = vsyncadd [#allocation6], 0
          %s109 = sshll.u32 %s1, 4
          %s110 = int_to_ptr.hbm [resolvable:$true] %s109
          %s111 = sshll.u32 [#allocation5], 4
          %s112 = int_to_ptr.vmem [resolvable:$true] %s111
          %114 = dma.hbm_to_vmem [thread:$0]  %s110, 16, %s112, [#allocation6]
        $region16: #{tpu_custom_call.1} parent=11 // pred_fallthru
          _
      $region12: #{tpu_custom_call.1} parent=5 // pred_fallthru
        _
      %p115 = scmp.lt.s32.totalorder %s15, 2
      // Predicated region
      $region17: #{tpu_custom_call.1} parent=5 // pred_check
        %p116 = pneg %p115
      $region18: #{tpu_custom_call.1} parent=5 // pred_check_branch
        %118 = sbr.rel (%p116) target = $region20
      $region19: #{tpu_custom_call.1} parent=5 // pred_region
        // Predicated region
        $region21: #{tpu_custom_call.1} parent=19 // pred_check
          %p119 = pneg %p35
        $region22: #{tpu_custom_call.1} parent=19 // pred_check_branch
          %121 = sbr.rel (%p119) target = $region24
        $region23: #{tpu_custom_call.1} parent=19 // pred_region
          %s122 = sand.u32 %s25, 1
          %s123 = scalar_lea.sflag [#allocation3], %s122
          %s124 = sand.u32 %s25, 1
          %s125 = smul.addr %s124, 8
          %s126 = scalar_lea.vmem [#allocation2], %s125
          %128 = vsyncadd %s123, 0
          %s129 = smul.addr %s15, 8
          %s130 = scalar_lea.hbm %s0, %s129
          %s132 = sshll.u32 %s130, 4
          %s133 = int_to_ptr.hbm [resolvable:$true] %s132
          %s134 = sshll.u32 %s126, 4
          %s135 = int_to_ptr.vmem [resolvable:$true] %s134
          %137 = dma.hbm_to_vmem [thread:$0]  %s133, 128, %s135, %s123
        $region24: #{tpu_custom_call.1} parent=19 // pred_fallthru
          _
      $region20: #{tpu_custom_call.1} parent=5 // pred_fallthru
        _
      %p138 = scmp.le.s32.totalorder 1, %s15
      %p139 = scmp.lt.s32.totalorder %s15, 3
      %p140 = pnand %p138, %p139
      %p141 = pneg %p140
      // Predicated region
      $region25: #{tpu_custom_call.1} parent=5 // pred_check
        _
      $region26: #{tpu_custom_call.1} parent=5 // pred_check_branch
        %143 = sbr.rel (%p140) target = $region28
      $region27: #{tpu_custom_call.1} parent=5 // pred_region
        %s144 = ssub.s32 %s15, 1
        %s145 = sand.u32 %s28, 1
        %s146 = scalar_lea.sflag [#allocation3], %s145
        %s147 = sand.u32 %s28, 1
        %s148 = smul.addr %s147, 8
        %s149 = scalar_lea.vmem [#allocation2], %s148
        // Predicated region
        $region29: #{tpu_custom_call.1} parent=27 // pred_check
          %p150 = pneg %p41
        $region30: #{tpu_custom_call.1} parent=27 // pred_check_branch
          %152 = sbr.rel (%p150) target = $region32
        $region31: #{tpu_custom_call.1} parent=27 // pred_region
          %154 = dma.done %s146, 128
        $region32: #{tpu_custom_call.1} parent=27 // pred_fallthru
          _
        // Predicated region
        $region33: #{tpu_custom_call.1} parent=27 // pred_check
          %p155 = pneg %p62
        $region34: #{tpu_custom_call.1} parent=27 // pred_check_branch
          %157 = sbr.rel (%p155) target = $region36
        $region35: #{tpu_custom_call.1} parent=27 // pred_region
          %159 = dma.done [#allocation6], 16
        $region36: #{tpu_custom_call.1} parent=27 // pred_fallthru
          _
        %s160 = sand.u32 %s28, 1
        %s161 = scalar_lea.sflag [#allocation3], %s160
        %s162 = sand.u32 %s28, 1
        %s163 = smul.addr %s162, 8
        %s164 = scalar_lea.vmem [#allocation2], %s163
        %p165 = pneg %p41
        %p166 = pneg %p38
        %p167 = pneg %p62
        %p168 = pneg %p59
        %p169 = pneg %p88
        %p170 = pneg %p85
        %s171 = sand.u32 %s75, 1
        %s172 = scalar_lea.sflag [#allocation4], %s171
        %s173 = sand.u32 %s75, 1
        %s174 = smul.addr %s173, 8
        %s175 = scalar_lea.vmem [#allocation7], %s174
        %v176 = vld [vmem:[%s149] sm:$0xff]
        %v177 = vld [vmem:[#allocation5] sm:$0x1]
        %v179 = vperm.slane %v177, 0
        %v181 = vadd.f32 %v176, %v179
        %182 = vst [vmem:[%s175] sm:$0xff] %v181
        %s183 = sand.u32 %s75, 1
        %s184 = scalar_lea.sflag [#allocation4], %s183
        %s185 = sand.u32 %s75, 1
        %s186 = smul.addr %s185, 8
        %s187 = scalar_lea.vmem [#allocation7], %s186
        // Predicated region
        $region37: #{tpu_custom_call.1} parent=27 // pred_check
          %p188 = pneg %p85
        $region38: #{tpu_custom_call.1} parent=27 // pred_check_branch
          %190 = sbr.rel (%p188) target = $region40
        $region39: #{tpu_custom_call.1} parent=27 // pred_region
          %192 = vsyncadd %s184, 0
          %s193 = smul.addr %s20, 8
          %s194 = scalar_lea.hbm %s2, %s193
          %s196 = sshll.u32 %s187, 4
          %s197 = int_to_ptr.vmem [resolvable:$true] %s196
          %s198 = sshll.u32 %s194, 4
          %s199 = int_to_ptr.hbm [resolvable:$true] %s198
          %201 = dma.vmem_to_hbm [thread:$0]  %s197, 128, %s199, %s184
        $region40: #{tpu_custom_call.1} parent=27 // pred_fallthru
          _
      $region28: #{tpu_custom_call.1} parent=5 // pred_fallthru
        _
      %p202 = scmp.le.s32.totalorder 2, %s15
      // Predicated region
      $region41: #{tpu_custom_call.1} parent=5 // pred_check
        %p203 = pneg %p202
      $region42: #{tpu_custom_call.1} parent=5 // pred_check_branch
        %205 = sbr.rel (%p203) target = $region44
      $region43: #{tpu_custom_call.1} parent=5 // pred_region
        %s206 = ssub.s32 %s15, 2
        // Predicated region
        $region45: #{tpu_custom_call.1} parent=43 // pred_check
          %p207 = pneg %p91
        $region46: #{tpu_custom_call.1} parent=43 // pred_check_branch
          %209 = sbr.rel (%p207) target = $region48
        $region47: #{tpu_custom_call.1} parent=43 // pred_region
          %s210 = sand.u32 %s76, 1
          %s211 = scalar_lea.sflag [#allocation4], %s210
          %s212 = sand.u32 %s76, 1
          %s213 = smul.addr %s212, 8
          %s214 = scalar_lea.vmem [#allocation7], %s213
          %216 = dma.done %s211, 128
        $region48: #{tpu_custom_call.1} parent=43 // pred_fallthru
          _
      $region44: #{tpu_custom_call.1} parent=5 // pred_fallthru
        _
    $region6: #{tpu_custom_call.1} parent=1 // loop_footer
      %s19 = sadd.s32 1, %s15
    $region7: #{tpu_custom_call.1} parent=1 // loop_footer_branch
      %14 = sbr.rel target = $region3
    $region8: #{tpu_custom_call.1} parent=1 // loop_exit
      _
    %217 = vsyncpa [#allocation3], 1
    %s218 = scalar_lea.sflag [#allocation3], 1
    %219 = vsyncpa %s218, 1
    %220 = vsyncpa [#allocation6], 1
    %221 = vsyncpa [#allocation4], 1
    %s222 = scalar_lea.sflag [#allocation4], 1
    %223 = vsyncpa %s222, 1

// kernel: tpu_custom_call.1
$region0: #{tpu_custom_call.1}
  #allocation0 [shape = 'u32[]', space=smem, size = 0x4, offset = 0x4, fixed_abs, tag = 'smem constant byte address 0x4 - core index']
  #allocation1 [shape = 'u32[72,128]{1,0:T(1,128)}', space=vmem, size = 0x9000, scoped, tag = 'internal scratch']
  #allocation2 [shape = 'bf16[16,32]{1,0:T(8,128)(2,1)}', space=vmem, size = 0x1000, scoped, tag = 'scratch operand']
  %s0 = inlined_call_operand.hbm [shape: f32[16,32], index: 0, kind: input, shape index: {}]
  %s1 = inlined_call_operand.hbm [shape: f32[1,32], index: 1, kind: input, shape index: {}]
  %s2 = inlined_call_operand.hbm [shape: f32[1,32], index: 2, kind: input, shape index: {}]
  %s3 = inlined_call_operand.hbm [shape: bf16[3,32,32], index: 3, kind: input, shape index: {}]
  %s4 = inlined_call_operand.vmem [shape: f32[3,1,32], index: 4, kind: input, shape index: {}]
  %s5 = inlined_call_operand.hbm [shape: bf16[3,16,32], index: 5, kind: output, shape index: {}]
  %s6 = sld [smem:[#allocation0]]
  $region73: #{tpu_custom_call.1} parent=0
    _
  %s8 = ssub.s32 1, %s6
  %s9 = scalar_select 0, %s8, %s6
  $region1: #{tpu_custom_call.1} parent=0
    #allocation3 [shape = 'u8[8192]{0}', space=vmem, size = 0x2000, scoped, tag = 'input window, operand 0, single buffered']
    #allocation4 [shape = 's32[2]{0}', space=sflag, size = 0x8, scoped, tag = 'scoped memory for tpu_custom_call.1']
    #allocation5 [shape = 's32[2]{0}', space=sflag, size = 0x8, scoped, tag = 'scoped memory for tpu_custom_call.1']
    #allocation6 [shape = 'u8[512]{0}', space=vmem, size = 0x400, scoped, tag = 'input window, operand 1, single buffered']
    #allocation7 [shape = 's32[1]{0}', space=sflag, size = 0x4, scoped, tag = 'scoped memory for tpu_custom_call.1']
    #allocation8 [shape = 'u8[512]{0}', space=vmem, size = 0x400, scoped, tag = 'input window, operand 2, single buffered']
    #allocation9 [shape = 'u8[16384]{0}', space=vmem, size = 0x4000, scoped, tag = 'input window, operand 3']
    #allocation10 [shape = 's32[2]{0}', space=sflag, size = 0x8, scoped, tag = 'scoped memory for tpu_custom_call.1']
    #allocation11 [shape = 'u8[8192]{0}', space=vmem, size = 0x2000, scoped, tag = 'output window, operand 0']
    %10 = vsyncpa [#allocation4], 0
    %11 = vsyncpa [#allocation7], 0
    %12 = vsyncpa [#allocation10], 0
    %s13 = scalar_lea.sflag [#allocation10], 1
    %14 = vsyncpa %s13, 0
    %15 = vsyncpa [#allocation5], 0
    %s16 = scalar_lea.sflag [#allocation5], 1
    %17 = vsyncpa %s16, 0
    loop: start=0, step=1, limit=5
    $region2: #{tpu_custom_call.1} parent=1 // loop_pre_header
      _
    $region3: #{tpu_custom_call.1} parent=1 // loop_header
      %s19 = sphi 0, %s23
      %p20 = scmp.ge.s32.totalorder %s19, 5
      %s26 = sphi 0, %s45
      %s27 = sphi 0, %s41
      %s28 = sphi 0, %s37
      %s29 = sphi 0, %s26
      %s30 = sphi 0, %s27
      %s31 = sphi 0, %s28
      %s32 = sphi 0, %s29
      %s33 = sphi 0, %s30
      %s34 = sphi 0, %s31
      %s48 = sphi 0, %s50
      %s51 = sphi 0, %s48
      %s52 = sphi 0, %s51
      %s68 = sphi 0, %s52
      %s72 = sphi 0, %s72
      %s74 = sphi 0, %s72
      %s75 = sphi 0, %s74
      %s89 = sphi 0, %s75
      %s93 = sphi 0, %s93
      %s95 = sphi 0, %s93
      %s96 = sphi 0, %s95
      %s110 = sphi 0, %s96
      %s118 = sphi 0, %s120
      %s121 = sphi 0, %s118
      %s122 = sphi 0, %s121
      %s138 = sphi 0, %s122
      %s146 = sphi 0, %s148
      %s149 = sphi 0, %s146
      %s150 = sphi 0, %s149
      %s166 = sphi 0, %s150
      %s176 = sphi 0, %s178
      %s179 = sphi 0, %s176
      %s180 = sphi 0, %s179
      %s196 = sphi 0, %s180
    $region4: #{tpu_custom_call.1} parent=1 // loop_header_branch
      %22 = sbr.rel (%p20) target = $region8
    $region5: #{tpu_custom_call.1} parent=1 // loop_body
      %s24 = ssub.s32 %s19, 1
      %s25 = ssub.s32 %s19, 2
      %s35 = sadd.s32 1, %s28
      %p36 = scmp.ge.s32.totalorder %s35, 1
      %s37 = scalar_select %p36, 0, %s35
      %s38 = sadd.s32 1, %s27
      %s39 = scalar_select %p36, %s38, %s27
      %p40 = scmp.ge.s32.totalorder %s39, 3
      %s41 = scalar_select %p40, 0, %s39
      %s42 = sadd.s32 1, %s26
      %s43 = scalar_select %p40, %s42, %s26
      %p44 = scmp.ge.s32.totalorder %s43, 1
      %s45 = scalar_select %p44, 0, %s43
      %s46 = ssub.s32 %s26, %s45
      %p47 = scmp.eq.s32.totalorder %s46, 0
      %s49 = sadd.s32 %s48, 1
      %s50 = scalar_select %p47, %s48, %s49
      %p53 = pneg %p47
      %p54 = scmp.eq.s32.totalorder %s19, 2
      %p55 = por %p53, %p54
      %p56 = scmp.ne.s32.totalorder %s48, %s51
      %p57 = scmp.eq.s32.totalorder %s19, 0
      %p58 = por %p56, %p57
      %p59 = scmp.ne.s32.totalorder %s48, %s51
      %p60 = scmp.eq.s32.totalorder %s24, 2
      %p61 = por %p59, %p60
      %p62 = scmp.ne.s32.totalorder %s51, %s52
      %p63 = scmp.eq.s32.totalorder %s24, 0
      %p64 = por %p62, %p63
      %p65 = scmp.ne.s32.totalorder %s51, %s52
      %p66 = scmp.eq.s32.totalorder %s25, 2
      %p67 = por %p65, %p66
      %p69 = scmp.ne.s32.totalorder %s52, %s68
      %p70 = scmp.eq.s32.totalorder %s25, 0
      %p71 = por %p69, %p70
      %s73 = sadd.s32 %s72, 1
      %p76 = scmp.eq.s32.totalorder %s19, 2
      %p77 = scmp.ne.s32.totalorder %s72, %s74
      %p78 = scmp.eq.s32.totalorder %s19, 0
      %p79 = por %p77, %p78
      %p80 = scmp.ne.s32.totalorder %s72, %s74
      %p81 = scmp.eq.s32.totalorder %s24, 2
      %p82 = por %p80, %p81
      %p83 = scmp.ne.s32.totalorder %s74, %s75
      %p84 = scmp.eq.s32.totalorder %s24, 0
      %p85 = por %p83, %p84
      %p86 = scmp.ne.s32.totalorder %s74, %s75
      %p87 = scmp.eq.s32.totalorder %s25, 2
      %p88 = por %p86, %p87
      %p90 = scmp.ne.s32.totalorder %s75, %s89
      %p91 = scmp.eq.s32.totalorder %s25, 0
      %p92 = por %p90, %p91
      %s94 = sadd.s32 %s93, 1
      %p97 = scmp.eq.s32.totalorder %s19, 2
      %p98 = scmp.ne.s32.totalorder %s93, %s95
      %p99 = scmp.eq.s32.totalorder %s19, 0
      %p100 = por %p98, %p99
      %p101 = scmp.ne.s32.totalorder %s93, %s95
      %p102 = scmp.eq.s32.totalorder %s24, 2
      %p103 = por %p101, %p102
      %p104 = scmp.ne.s32.totalorder %s95, %s96
      %p105 = scmp.eq.s32.totalorder %s24, 0
      %p106 = por %p104, %p105
      %p107 = scmp.ne.s32.totalorder %s95, %s96
      %p108 = scmp.eq.s32.totalorder %s25, 2
      %p109 = por %p107, %p108
      %p111 = scmp.ne.s32.totalorder %s96, %s110
      %p112 = scmp.eq.s32.totalorder %s25, 0
      %p113 = por %p111, %p112
      %s114 = ssub.s32 %s27, %s41
      %s115 = ssub.s32 %s28, %s37
      %s116 = sor.u32 %s114, %s115
      %p117 = scmp.eq.s32.totalorder %s116, 0
      %s119 = sadd.s32 %s118, 1
      %s120 = scalar_select %p117, %s118, %s119
      %p123 = pneg %p117
      %p124 = scmp.eq.s32.totalorder %s19, 2
      %p125 = por %p123, %p124
      %p126 = scmp.ne.s32.totalorder %s118, %s121
      %p127 = scmp.eq.s32.totalorder %s19, 0
      %p128 = por %p126, %p127
      %p129 = scmp.ne.s32.totalorder %s118, %s121
      %p130 = scmp.eq.s32.totalorder %s24, 2
      %p131 = por %p129, %p130
      %p132 = scmp.ne.s32.totalorder %s121, %s122
      %p133 = scmp.eq.s32.totalorder %s24, 0
      %p134 = por %p132, %p133
      %p135 = scmp.ne.s32.totalorder %s121, %s122
      %p136 = scmp.eq.s32.totalorder %s25, 2
      %p137 = por %p135, %p136
      %p139 = scmp.ne.s32.totalorder %s122, %s138
      %p140 = scmp.eq.s32.totalorder %s25, 0
      %p141 = por %p139, %p140
      %s142 = ssub.s32 %s27, %s41
      %s143 = ssub.s32 %s28, %s37
      %s144 = sor.u32 %s142, %s143
      %p145 = scmp.eq.s32.totalorder %s144, 0
      %s147 = sadd.s32 %s146, 1
      %s148 = scalar_select %p145, %s146, %s147
      %p151 = pneg %p145
      %p152 = scmp.eq.s32.totalorder %s19, 2
      %p153 = por %p151, %p152
      %p154 = scmp.ne.s32.totalorder %s146, %s149
      %p155 = scmp.eq.s32.totalorder %s19, 0
      %p156 = por %p154, %p155
      %p157 = scmp.ne.s32.totalorder %s146, %s149
      %p158 = scmp.eq.s32.totalorder %s24, 2
      %p159 = por %p157, %p158
      %p160 = scmp.ne.s32.totalorder %s149, %s150
      %p161 = scmp.eq.s32.totalorder %s24, 0
      %p162 = por %p160, %p161
      %p163 = scmp.ne.s32.totalorder %s149, %s150
      %p164 = scmp.eq.s32.totalorder %s25, 2
      %p165 = por %p163, %p164
      %p167 = scmp.ne.s32.totalorder %s150, %s166
      %p168 = scmp.eq.s32.totalorder %s25, 0
      %p169 = por %p167, %p168
      %s170 = ssub.s32 %s27, %s41
      %s171 = ssub.s32 %s26, %s45
      %s172 = sor.u32 %s170, %s171
      %s173 = ssub.s32 %s28, %s37
      %s174 = sor.u32 %s172, %s173
      %p175 = scmp.eq.s32.totalorder %s174, 0
      %s177 = sadd.s32 %s176, 1
      %s178 = scalar_select %p175, %s176, %s177
      %p181 = pneg %p175
      %p182 = scmp.eq.s32.totalorder %s19, 2
      %p183 = por %p181, %p182
      %p184 = scmp.ne.s32.totalorder %s176, %s179
      %p185 = scmp.eq.s32.totalorder %s19, 0
      %p186 = por %p184, %p185
      %p187 = scmp.ne.s32.totalorder %s176, %s179
      %p188 = scmp.eq.s32.totalorder %s24, 2
      %p189 = por %p187, %p188
      %p190 = scmp.ne.s32.totalorder %s179, %s180
      %p191 = scmp.eq.s32.totalorder %s24, 0
      %p192 = por %p190, %p191
      %p193 = scmp.ne.s32.totalorder %s179, %s180
      %p194 = scmp.eq.s32.totalorder %s25, 2
      %p195 = por %p193, %p194
      %p197 = scmp.ne.s32.totalorder %s180, %s196
      %p198 = scmp.eq.s32.totalorder %s25, 0
      %p199 = por %p197, %p198
      %p200 = scmp.le.s32.totalorder 1, %s19
      %p201 = scmp.lt.s32.totalorder %s19, 4
      %p202 = pnand %p200, %p201
      %p203 = pneg %p202
      // Predicated region
      $region9: #{tpu_custom_call.1} parent=5 // pred_check
        _
      $region10: #{tpu_custom_call.1} parent=5 // pred_check_branch
        %205 = sbr.rel (%p202) target = $region12
      $region11: #{tpu_custom_call.1} parent=5 // pred_region
        %s206 = ssub.s32 %s19, 1
        // Predicated region
        $region13: #{tpu_custom_call.1} parent=11 // pred_check
          %p207 = pneg %p64
        $region14: #{tpu_custom_call.1} parent=11 // pred_check_branch
          %209 = sbr.rel (%p207) target = $region16
        $region15: #{tpu_custom_call.1} parent=11 // pred_region
          %s210 = smul.u32 2, %s29
          %212 = vsyncadd [#allocation4], 0
          %s213 = smul.addr %s210, 8
          %s214 = scalar_lea.hbm %s0, %s213
          %s215 = sshll.u32 %s214, 4
          %s216 = int_to_ptr.hbm [resolvable:$true] %s215
          %s217 = sshll.u32 [#allocation3], 4
          %s218 = int_to_ptr.vmem [resolvable:$true] %s217
          %223 = dma.hbm_to_vmem [thread:$0]  %s216, 256, %s218, [#allocation4], 128, 128, 8
        $region16: #{tpu_custom_call.1} parent=11 // pred_fallthru
          _
        // Predicated region
        $region17: #{tpu_custom_call.1} parent=11 // pred_check
          %p224 = pneg %p85
        $region18: #{tpu_custom_call.1} parent=11 // pred_check_branch
          %226 = sbr.rel (%p224) target = $region20
        $region19: #{tpu_custom_call.1} parent=11 // pred_region
          %228 = vsyncadd [#allocation7], 0
          %s230 = sshll.u32 %s1, 4
          %s231 = int_to_ptr.hbm [resolvable:$true] %s230
          %s232 = sshll.u32 [#allocation6], 4
          %s233 = int_to_ptr.vmem [resolvable:$true] %s232
          %235 = dma.hbm_to_vmem [thread:$0]  %s231, 16, %s233, [#allocation7]
        $region20: #{tpu_custom_call.1} parent=11 // pred_fallthru
          _
        // Predicated region
        $region21: #{tpu_custom_call.1} parent=11 // pred_check
          %p236 = pneg %p106
        $region22: #{tpu_custom_call.1} parent=11 // pred_check_branch
          %238 = sbr.rel (%p236) target = $region24
        $region23: #{tpu_custom_call.1} parent=11 // pred_region
          %240 = vsyncadd [#allocation7], 0
          %s242 = sshll.u32 %s2, 4
          %s243 = int_to_ptr.hbm [resolvable:$true] %s242
          %s244 = sshll.u32 [#allocation8], 4
          %s245 = int_to_ptr.vmem [resolvable:$true] %s244
          %247 = dma.hbm_to_vmem [thread:$0]  %s243, 16, %s245, [#allocation7]
        $region24: #{tpu_custom_call.1} parent=11 // pred_fallthru
          _
      $region12: #{tpu_custom_call.1} parent=5 // pred_fallthru
        _
      %p248 = scmp.lt.s32.totalorder %s19, 3
      // Predicated region
      $region25: #{tpu_custom_call.1} parent=5 // pred_check
        %p249 = pneg %p248
      $region26: #{tpu_custom_call.1} parent=5 // pred_check_branch
        %251 = sbr.rel (%p249) target = $region28
      $region27: #{tpu_custom_call.1} parent=5 // pred_region
        // Predicated region
        $region29: #{tpu_custom_call.1} parent=27 // pred_check
          %p252 = pneg %p128
        $region30: #{tpu_custom_call.1} parent=27 // pred_check_branch
          %254 = sbr.rel (%p252) target = $region32
        $region31: #{tpu_custom_call.1} parent=27 // pred_region
          %s255 = sand.u32 %s118, 1
          %s256 = scalar_lea.sflag [#allocation10], %s255
          %s257 = sand.u32 %s118, 1
          %s258 = smul.addr %s257, 16
          %s259 = scalar_lea.vmem [#allocation9], %s258
          %261 = vsyncadd %s256, 0
          %s262 = smul.addr %s27, 4
          %s263 = sadd.s32 %s28, %s262
          %s264 = smul.addr %s263, 4
          %s265 = scalar_lea.hbm %s3, %s264
          %s266 = sshll.u32 %s265, 4
          %s267 = int_to_ptr.hbm [resolvable:$true] %s266
          %s268 = sshll.u32 %s259, 4
          %s269 = int_to_ptr.vmem [resolvable:$true] %s268
          %274 = dma.hbm_to_vmem [thread:$0]  %s267, 256, %s269, %s256, 64, 64, 4
        $region32: #{tpu_custom_call.1} parent=27 // pred_fallthru
          _
        // Predicated region
        $region33: #{tpu_custom_call.1} parent=27 // pred_check
          %p275 = pneg %p156
        $region34: #{tpu_custom_call.1} parent=27 // pred_check_branch
          %277 = sbr.rel (%p275) target = $region36
        $region35: #{tpu_custom_call.1} parent=27 // pred_region
          %p278 = scmp.lt.s32.totalorder %s27, 2
          %s279 = scalar_select %p278, %s27, 2
          %p280 = scmp.lt.s32.totalorder %s28, 0
          %s281 = scalar_select %p280, %s28, 0
          %s282 = sadd.s32 %s281, %s279
          %s283 = scalar_lea.vmem %s4, %s282
        $region36: #{tpu_custom_call.1} parent=27 // pred_fallthru
          _
      $region28: #{tpu_custom_call.1} parent=5 // pred_fallthru
        _
      %p284 = scmp.le.s32.totalorder 1, %s19
      %p285 = scmp.lt.s32.totalorder %s19, 4
      %p286 = pnand %p284, %p285
      %p287 = pneg %p286
      // Predicated region
      $region37: #{tpu_custom_call.1} parent=5 // pred_check
        _
      $region38: #{tpu_custom_call.1} parent=5 // pred_check_branch
        %289 = sbr.rel (%p286) target = $region40
      $region39: #{tpu_custom_call.1} parent=5 // pred_region
        %s290 = ssub.s32 %s19, 1
        // Predicated region
        $region41: #{tpu_custom_call.1} parent=39 // pred_check
          %p291 = pneg %p64
        $region42: #{tpu_custom_call.1} parent=39 // pred_check_branch
          %293 = sbr.rel (%p291) target = $region44
        $region43: #{tpu_custom_call.1} parent=39 // pred_region
          %295 = dma.done [#allocation4], 256
        $region44: #{tpu_custom_call.1} parent=39 // pred_fallthru
          _
        // Predicated region
        $region45: #{tpu_custom_call.1} parent=39 // pred_check
          %p296 = pneg %p85
        $region46: #{tpu_custom_call.1} parent=39 // pred_check_branch
          %298 = sbr.rel (%p296) target = $region48
        $region47: #{tpu_custom_call.1} parent=39 // pred_region
          %300 = dma.done [#allocation7], 16
        $region48: #{tpu_custom_call.1} parent=39 // pred_fallthru
          _
        // Predicated region
        $region49: #{tpu_custom_call.1} parent=39 // pred_check
          %p301 = pneg %p106
        $region50: #{tpu_custom_call.1} parent=39 // pred_check_branch
          %303 = sbr.rel (%p301) target = $region52
        $region51: #{tpu_custom_call.1} parent=39 // pred_region
          %305 = dma.done [#allocation7], 16
        $region52: #{tpu_custom_call.1} parent=39 // pred_fallthru
          _
        %s306 = sand.u32 %s121, 1
        %s307 = scalar_lea.sflag [#allocation10], %s306
        %s308 = sand.u32 %s121, 1
        %s309 = smul.addr %s308, 16
        %s310 = scalar_lea.vmem [#allocation9], %s309
        // Predicated region
        $region53: #{tpu_custom_call.1} parent=39 // pred_check
          %p311 = pneg %p134
        $region54: #{tpu_custom_call.1} parent=39 // pred_check_branch
          %313 = sbr.rel (%p311) target = $region56
        $region55: #{tpu_custom_call.1} parent=39 // pred_region
          %315 = dma.done %s307, 256
        $region56: #{tpu_custom_call.1} parent=39 // pred_fallthru
          _
        %p316 = pneg %p64
        %p317 = pneg %p61
        %p318 = pneg %p85
        %p319 = pneg %p82
        %p320 = pneg %p106
        %p321 = pneg %p103
        %s322 = sand.u32 %s121, 1
        %s323 = scalar_lea.sflag [#allocation10], %s322
        %s324 = sand.u32 %s121, 1
        %s325 = smul.addr %s324, 16
        %s326 = scalar_lea.vmem [#allocation9], %s325
        %p327 = pneg %p134
        %p328 = pneg %p131
        %p329 = scmp.lt.s32.totalorder %s30, 2
        %s330 = scalar_select %p329, %s30, 2
        %p331 = scmp.lt.s32.totalorder %s31, 0
        %s332 = scalar_select %p331, %s31, 0
        %s333 = sadd.s32 %s332, %s330
        %s334 = scalar_lea.vmem %s4, %s333
        %p335 = pneg %p162
        %p336 = pneg %p159
        %p337 = pneg %p192
        %p338 = pneg %p189
        %s339 = sand.u32 %s179, 1
        %s340 = scalar_lea.sflag [#allocation5], %s339
        %s341 = sand.u32 %s179, 1
        %s342 = smul.addr %s341, 8
        %s343 = scalar_lea.vmem [#allocation11], %s342
        %s344 = smul.u32 2, %s29
        %p345 = scmp.lt.s32.totalorder %s30, 2
        %s346 = scalar_select %p345, %s30, 2
        %p347 = scmp.lt.s32.totalorder %s31, 0
        %s348 = scalar_select %p347, %s31, 0
        %s349 = sadd.s32 %s348, %s346
        %s350 = scalar_lea.vmem %s4, %s349
        %s351 = smul.u32 2, %s29
        %p353 = scmp.eq.s32.totalorder %s30, 0
        %p354 = scmp.eq.s32.totalorder %s31, 0
        %p355 = pnand %p353, %p354
        %p356 = pneg %p355
        // Predicated region
        $region57: #{tpu_custom_call.1} parent=39 // pred_check
          _
        $region58: #{tpu_custom_call.1} parent=39 // pred_check_branch
          %358 = sbr.rel (%p355) target = $region60
        $region59: #{tpu_custom_call.1} parent=39 // pred_region
          %v359 = vld [vmem:[#allocation3] sm:$0xff]
          %v360 = vld [vmem:[#allocation3 + $0x8] sm:$0xff]
          %vm361 = vcmask 261120
          %v362 = vsel %vm361, %v359, 0.0
          %363 = vadd.xlane.f32.xlu0 %v362
          %v364 = vpop.xlane.xlu0 %363
          %v365 = vsel %vm361, %v360, 0.0
          %366 = vadd.xlane.f32.xlu0 %v365
          %v367 = vpop.xlane.xlu0 %366
          %v368 = vrcp.pop 32.0
          %v369 = vmul.f32 32.0, %v368
          %v370 = vsub.f32 1.0, %v369
          %v371 = vmul.f32 %v368, %v370
          %v372 = vadd.f32 %v368, %v371
          %vm373 = vweird.f32 %v368
          %v374 = vsel %vm373, %v368, %v372
          %v375 = vmul.f32 %v364, %v374
          %v376 = vmul.f32 %v367, %v374
          %v377 = vsub.f32 %v359, %v375
          %v378 = vsub.f32 %v360, %v376
          %v379 = vmul.f32 %v377, %v377
          %v380 = vmul.f32 %v378, %v378
          %v381 = vsel %vm361, %v379, 0.0
          %382 = vadd.xlane.f32.xlu0 %v381
          %v383 = vpop.xlane.xlu0 %382
          %v384 = vsel %vm361, %v380, 0.0
          %385 = vadd.xlane.f32.xlu0 %v384
          %v386 = vpop.xlane.xlu0 %385
          %v387 = vmul.f32 %v383, %v374
          %v388 = vmul.f32 %v386, %v374
          %v389 = vadd.f32 %v387, 1e-05
          %v390 = vadd.f32 %v388, 1e-05
          %v391 = vrsqrt.pop %v389
          %v392 = vmul.f32 %v391, %v389
          %v393 = vmul.f32 %v392, %v391
          %v394 = vmul.f32 0.5, %v393
          %v395 = vsub.f32 1.5, %v394
          %v396 = vmul.f32 %v391, %v395
          %vm397 = vweird.f32 %v389
          %vm398 = vweird.f32 %v391
          %vm399 = vmor %vm397, %vm398
          %v400 = vsel %vm399, %v391, %v396
          %v401 = vrsqrt.pop %v390
          %v402 = vmul.f32 %v401, %v390
          %v403 = vmul.f32 %v402, %v401
          %v404 = vmul.f32 0.5, %v403
          %v405 = vsub.f32 1.5, %v404
          %v406 = vmul.f32 %v401, %v405
          %vm407 = vweird.f32 %v390
          %vm408 = vweird.f32 %v401
          %vm409 = vmor %vm407, %vm408
          %v410 = vsel %vm409, %v401, %v406
          %v411 = vmul.f32 %v377, %v400
          %v412 = vmul.f32 %v378, %v410
          %v413 = vld [vmem:[#allocation6] sm:$0x1]
          %v415 = vperm.slane %v413, 0
          %v417 = vmul.f32 %v411, %v415
          %v418 = vmul.f32 %v412, %v415
          %v419 = vld [vmem:[#allocation8] sm:$0x1]
          %v421 = vperm.slane %v419, 0
          %v423 = vadd.f32 %v417, %v421
          %v424 = vadd.f32 %v418, %v421
          %v425 = vpack.c.bf16 %v423, %v423
          %v426 = vpack.c.bf16 %v424, %v424
          %vm427 = vcmask 257024
          %428 = vst.msk [vmem:[#allocation2] sm:$0xf] %vm427, %v425
          %429 = vst.msk [vmem:[#allocation2 + $0x4] sm:$0xf] %vm427, %v426
        $region60: #{tpu_custom_call.1} parent=39 // pred_fallthru
          _
        %v430 = vld [vmem:[#allocation2] sm:$0xf]
        %v431 = vld [vmem:[#allocation2 + $0x4] sm:$0xf]
        %v432 = vld [vmem:[%s310] sm:$0xf]
        %v433 = vld [vmem:[%s310 + $0x4] sm:$0xf]
        %v434 = vld [vmem:[%s310 + $0x8] sm:$0xf]
        %v435 = vld [vmem:[%s310 + $0xc] sm:$0xf]
        %v436 = vld [vmem:[%s350] sm:$0x1]
        %v438 = vperm.slane %v436, 0
        %v442 = vunpack.c.l.b16 %v430
        %v443 = vunpack.c.l.b16 %v431
        %v444 = vpack.c.b16 %v443, %v442
        %v449 = vunpack.c.l.b16 %v432
        %v450 = vunpack.c.l.b16 %v433
        %v451 = vunpack.c.l.b16 %v434
        %v452 = vunpack.c.l.b16 %v435
        %v453 = vpack.c.b16 %v450, %v449
        %v454 = vpack.c.b16 %v452, %v451
        %vm457 = vcmask 261120
        %v459 = vsel %vm457, %v444, 0
        %461 = vmatpush.bf16.msra.mxu0 0
        %462 = vmatpush.bf16.msra.mxu0 0
        %463 = vmatpush.bf16.msra.mxu0 0
        %464 = vmatpush.bf16.msra.mxu0 0
        %465 = vmatpush.bf16.msra.mxu0 0
        %466 = vmatpush.bf16.msra.mxu0 0
        %467 = vmatpush.bf16.msra.mxu0 %v454
        %468 = vmatpush.bf16.msra.mxu0 %v453
        %469 = vmatmul.bf16.gmra.mxu0 %v459
        %v470 = vpop.f32.mrf.mxu0
        %v471 = vadd.f32 %v438, %v470
        %v472 = vpop.f32.mrf.mxu0
        %v473 = vadd.f32 %v438, %v472
        %474 = vdwg.mxu0
        %v475 = vpack.c.bf16 %v471, %v471
        %v476 = vpack.c.bf16 %v473, %v473
        %vm477 = vcmask 257024
        %478 = vst.msk [vmem:[%s343] sm:$0xf] %vm477, %v475
        %479 = vst.msk [vmem:[%s343 + $0x4] sm:$0xf] %vm477, %v476
        %s480 = sand.u32 %s179, 1
        %s481 = scalar_lea.sflag [#allocation5], %s480
        %s482 = sand.u32 %s179, 1
        %s483 = smul.addr %s482, 8
        %s484 = scalar_lea.vmem [#allocation11], %s483
        // Predicated region
        $region61: #{tpu_custom_call.1} parent=39 // pred_check
          %p485 = pneg %p189
        $region62: #{tpu_custom_call.1} parent=39 // pred_check_branch
          %487 = sbr.rel (%p485) target = $region64
        $region63: #{tpu_custom_call.1} parent=39 // pred_region
          %s488 = smul.u32 2, %s29
          %490 = vsyncadd %s481, 0
          %s491 = sadd.s32 %s31, %s488
          %s492 = smul.addr %s30, 2
          %s493 = sadd.s32 %s491, %s492
          %s494 = smul.addr %s493, 4
          %s495 = scalar_lea.hbm %s5, %s494
          %s496 = sshll.u32 %s484, 4
          %s497 = int_to_ptr.vmem [resolvable:$true] %s496
          %s498 = sshll.u32 %s495, 4
          %s499 = int_to_ptr.hbm [resolvable:$true] %s498
          %504 = dma.vmem_to_hbm [thread:$0]  %s497, 128, %s499, %s481, 64, 64, 4
        $region64: #{tpu_custom_call.1} parent=39 // pred_fallthru
          _
      $region40: #{tpu_custom_call.1} parent=5 // pred_fallthru
        _
      %p505 = scmp.le.s32.totalorder 2, %s19
      // Predicated region
      $region65: #{tpu_custom_call.1} parent=5 // pred_check
        %p506 = pneg %p505
      $region66: #{tpu_custom_call.1} parent=5 // pred_check_branch
        %508 = sbr.rel (%p506) target = $region68
      $region67: #{tpu_custom_call.1} parent=5 // pred_region
        %s509 = ssub.s32 %s19, 2
        // Predicated region
        $region69: #{tpu_custom_call.1} parent=67 // pred_check
          %p510 = pneg %p195
        $region70: #{tpu_custom_call.1} parent=67 // pred_check_branch
          %512 = sbr.rel (%p510) target = $region72
        $region71: #{tpu_custom_call.1} parent=67 // pred_region
          %s513 = sand.u32 %s180, 1
          %s514 = scalar_lea.sflag [#allocation5], %s513
          %s515 = sand.u32 %s180, 1
          %s516 = smul.addr %s515, 8
          %s517 = scalar_lea.vmem [#allocation11], %s516
          %519 = dma.done %s514, 128
        $region72: #{tpu_custom_call.1} parent=67 // pred_fallthru
          _
      $region68: #{tpu_custom_call.1} parent=5 // pred_fallthru
        _
    $region6: #{tpu_custom_call.1} parent=1 // loop_footer
      %s23 = sadd.s32 1, %s19
    $region7: #{tpu_custom_call.1} parent=1 // loop_footer_branch
      %18 = sbr.rel target = $region3
    $region8: #{tpu_custom_call.1} parent=1 // loop_exit
      _
    %520 = vsyncpa [#allocation4], 1
    %s521 = scalar_lea.sflag [#allocation4], 1
    %522 = vsyncpa %s521, 1
    %523 = vsyncpa [#allocation7], 1
    %524 = vsyncpa [#allocation10], 1
    %s525 = scalar_lea.sflag [#allocation10], 1
    %526 = vsyncpa %s525, 1
    %527 = vsyncpa [#allocation5], 1
    %s528 = scalar_lea.sflag [#allocation5], 1
    %529 = vsyncpa %s528, 1

</llo_original>
